<compile_context>
chip_gen: v7x
topology: tpu7x:2x2x1
jax: 0.10.0
libtpu: 0.0.40
codegen_flags: <defaults>
</compile_context>

<pallas_src>
import functools

import jax
import jax.numpy as jnp
from jax.experimental import pallas as pl
from jax.experimental.pallas import tpu as pltpu


# ---------------------------------------------------------------------------
# Helpers
# ---------------------------------------------------------------------------

def _round_up(n, m):
    return ((n + m - 1) // m) * m


def _spec(shape, index_map, n_buffers=None):
    """BlockSpec, optionally with an explicit buffer count (Buffered(1) for
    grid-invariant operands). Falls back to default buffering if this jax
    version's BlockSpec has no pipeline_mode kwarg."""
    if n_buffers is None:
        return pl.BlockSpec(shape, index_map)
    try:
        return pl.BlockSpec(shape, index_map, pipeline_mode=pl.Buffered(n_buffers))
    except TypeError:
        return pl.BlockSpec(shape, index_map)


def _vmem_ceiling_bytes():
    """~80% of physical VMEM: ≈51 MiB on v7x (64 MiB), ≈102 MiB on v5e/v6e
    (128 MiB). Leaves headroom for compiler internal scratch / semaphores."""
    try:
        cap = int(pltpu.get_tpu_info().vmem_capacity_bytes)
    except Exception:
        cap = 64 * 1024 * 1024
    return max(16 * 1024 * 1024, int(cap * 4 // 5))


def _pick_batch_tile(batch, vmem_ceiling):
    """Batch tile: >=2 grid steps when possible (v7x megacore sharding), tiles
    up to 512 on big-VMEM parts (v5e/v6e), 256 otherwise."""
    min_t = 16  # bf16 sublane-friendly
    if batch <= 2 * min_t:
        return _round_up(batch, min_t)
    max_t = 512 if vmem_ceiling >= 80 * (1 << 20) else 256
    half = _round_up((batch + 1) // 2, min_t)  # keep at least 2 grid steps
    return min(max_t, half)


def _pick_hidden_tile(in_p, hid_p, out_p, tb, vmem_ceiling, forced):
    """Return None for the fused (fully-resident-weights) path, otherwise the
    hidden-dim tile size (multiple of 128 dividing hid_p)."""
    if forced is not None:
        return forced
    resident = in_p * hid_p * 2 + hid_p * out_p * 2           # bf16, Buffered(1)
    fixed = 2 * tb * in_p * 2 + 2 * tb * out_p * 4 + hid_p * 4 + out_p * 4
    if resident + fixed <= vmem_ceiling // 2:
        return None
    budget = vmem_ceiling // 2 - (2 * tb * in_p * 2 + 2 * tb * out_p * 4
                                  + tb * out_p * 4 + out_p * 4)
    for th in (1024, 768, 512, 384, 256, 128):
        if hid_p % th == 0:
            tiles = 2 * (in_p * th * 2) + 2 * (th * out_p * 2) + 2 * (th * 4)
            if tiles <= budget:
                return th
    return 128


# ---------------------------------------------------------------------------
# Kernels
# ---------------------------------------------------------------------------

def mlp_fused_kernel(x_ref, w1_ref, b1_ref, w2_ref, b2_ref, o_ref):
    # First linear (MXU, bf16 in / f32 accumulate) + bias + ReLU in f32 (VPU).
    h = jnp.dot(x_ref[...], w1_ref[...], preferred_element_type=jnp.float32)
    h = jnp.maximum(h + b1_ref[...], 0.0)                    # (TB, Hp) + (1, Hp)
    # Second linear: cast activations back to bf16 only at the dot boundary.
    out = jnp.dot(h.astype(w2_ref.dtype), w2_ref[...],
                  preferred_element_type=jnp.float32)
    o_ref[...] = (out + b2_ref[...]).astype(o_ref.dtype)


def mlp_hidden_tiled_kernel(x_ref, w1_ref, b1_ref, w2_ref, b2_ref, o_ref, acc_ref):
    # Hidden dim split across grid axis 1 ("arbitrary"). ReLU is elementwise in
    # the hidden dim, so per-chunk relu(x@W1_k + b1_k) @ W2_k summed over k is
    # exactly the fused result.
    k = pl.program_id(1)

    @pl.when(k == 0)
    def _():
        acc_ref[...] = jnp.zeros_like(acc_ref)

    h = jnp.dot(x_ref[...], w1_ref[...], preferred_element_type=jnp.float32)
    h = jnp.maximum(h + b1_ref[...], 0.0)
    acc_ref[...] += jnp.dot(h.astype(w2_ref.dtype), w2_ref[...],
                            preferred_element_type=jnp.float32)

    @pl.when(k == pl.num_programs(1) - 1)
    def _():
        o_ref[...] = (acc_ref[...] + b2_ref[...]).astype(o_ref.dtype)


# ---------------------------------------------------------------------------
# Host-side wrappers
# ---------------------------------------------------------------------------

def prepare_params(w1_t, b1, w2_t, b2):
    """One-time padding + bf16 cast of the weights (hoisted out of forward so
    the per-call wrapper only pads x). Feature dims are lane-padded to
    multiples of 128 with zeros (exact: zero rows/cols contribute nothing)."""
    in_f, hid = w1_t.shape
    out_f = w2_t.shape[1]
    in_p, hid_p, out_p = (_round_up(d, 128) for d in (in_f, hid, out_f))
    w1p = jnp.zeros((in_p, hid_p), jnp.bfloat16).at[:in_f, :hid].set(
        w1_t.astype(jnp.bfloat16))
    w2p = jnp.zeros((hid_p, out_p), jnp.bfloat16).at[:hid, :out_f].set(
        w2_t.astype(jnp.bfloat16))
    b1p = jnp.zeros((1, hid_p), jnp.float32).at[0, :hid].set(b1.astype(jnp.float32))
    b2p = jnp.zeros((1, out_p), jnp.float32).at[0, :out_f].set(b2.astype(jnp.float32))
    return (w1p, b1p, w2p, b2p), out_f


@functools.partial(jax.jit,
                   static_argnames=("out_features", "batch_tile", "hidden_tile"))
def ewc_forward(x, w1p, b1p, w2p, b2p, *, out_features,
                batch_tile=None, hidden_tile=None):
    """Fused Linear->ReLU->Linear on pre-padded params.

    x:   (B, in_features)  float32
    w1p: (in_p, hid_p)     bf16   (padded, pre-transposed nn.Linear weight)
    b1p: (1, hid_p)        f32
    w2p: (hid_p, out_p)    bf16
    b2p: (1, out_p)        f32
    """
    B, in_f = x.shape
    in_p, hid_p = w1p.shape
    out_p = w2p.shape[1]

    vmem_ceiling = _vmem_ceiling_bytes()
    TB = batch_tile if batch_tile is not None else _pick_batch_tile(B, vmem_ceiling)
    B_p = _round_up(B, TB)
    TH = _pick_hidden_tile(in_p, hid_p, out_p, TB, vmem_ceiling, hidden_tile)

    # Per-call x padding only (weights were padded once in prepare_params).
    xp = jnp.zeros((B_p, in_p), jnp.bfloat16).at[:B, :in_f].set(
        x.astype(jnp.bfloat16))

    mib = 1 << 20
    if TH is None:
        # -------- fused path: weights fully VMEM-resident, single-buffered ----
        needed = (2 * TB * in_p * 2          # x blocks (bf16, double-buffered)
                  + 2 * TB * out_p * 4       # out blocks (f32, double-buffered)
                  + in_p * hid_p * 2         # w1 (Buffered(1))
                  + hid_p * out_p * 2        # w2 (Buffered(1))
                  + hid_p * 4 + out_p * 4)   # biases (Buffered(1))
        vmem_limit = int(min(max(2 * needed, 16 * mib), vmem_ceiling))
        grid = (B_p // TB,)
        out = pl.pallas_call(
            mlp_fused_kernel,
            # NOTE: bf16 out_shape would halve output HBM traffic; kept f32 for
            # tight numerics (accumulator precision preserved to HBM).
            out_shape=jax.ShapeDtypeStruct((B_p, out_p), jnp.float32),
            grid_spec=pltpu.PrefetchScalarGridSpec(
                num_scalar_prefetch=0,
                grid=grid,
                in_specs=[
                    _spec((TB, in_p), lambda i: (i, 0)),              # x: batch-tiled
                    _spec((in_p, hid_p), lambda i: (0, 0), 1),        # w1: resident
                    _spec((1, hid_p), lambda i: (0, 0), 1),           # b1: resident
                    _spec((hid_p, out_p), lambda i: (0, 0), 1),       # w2: resident
                    _spec((1, out_p), lambda i: (0, 0), 1),           # b2: resident
                ],
                out_specs=pl.BlockSpec((TB, out_p), lambda i: (i, 0)),
            ),
            compiler_params=pltpu.CompilerParams(
                dimension_semantics=("parallel",),
                vmem_limit_bytes=vmem_limit,
            ),
        )(xp, w1p, b1p, w2p, b2p)
    else:
        # -------- hidden-tiled path: contraction split across grid axis 1 -----
        needed = (2 * TB * in_p * 2          # x blocks (constant over k, 2 bufs)
                  + 2 * in_p * TH * 2        # w1 tiles
                  + 2 * TH * 4               # b1 tiles
                  + 2 * TH * out_p * 2       # w2 tiles
                  + out_p * 4                # b2 (Buffered(1))
                  + 2 * TB * out_p * 4       # out blocks
                  + TB * out_p * 4)          # acc scratch
        vmem_limit = int(min(max(2 * needed, 16 * mib), vmem_ceiling))
        grid = (B_p // TB, hid_p // TH)
        out = pl.pallas_call(
            mlp_hidden_tiled_kernel,
            out_shape=jax.ShapeDtypeStruct((B_p, out_p), jnp.float32),
            grid_spec=pltpu.PrefetchScalarGridSpec(
                num_scalar_prefetch=0,
                grid=grid,
                in_specs=[
                    _spec((TB, in_p), lambda i, k: (i, 0)),           # x
                    _spec((in_p, TH), lambda i, k: (0, k)),           # w1 chunk
                    _spec((1, TH), lambda i, k: (0, k)),              # b1 chunk
                    _spec((TH, out_p), lambda i, k: (k, 0)),          # w2 chunk
                    _spec((1, out_p), lambda i, k: (0, 0), 1),        # b2: resident
                ],
                out_specs=pl.BlockSpec((TB, out_p), lambda i, k: (i, 0)),
                scratch_shapes=[pltpu.VMEM((TB, out_p), jnp.float32)],
            ),
            compiler_params=pltpu.CompilerParams(
                dimension_semantics=("parallel", "arbitrary"),
                vmem_limit_bytes=vmem_limit,
            ),
        )(xp, w1p, b1p, w2p, b2p)

    # Strip padding (layout glue outside the kernel).
    return out[:B, :out_features].astype(x.dtype)


# ---------------------------------------------------------------------------
# Param init / references
# ---------------------------------------------------------------------------

def make_params(key, input_size, hidden_size, output_size, dtype=jnp.float32):
    """Deterministic init matching nn.Linear shapes; weights returned
    pre-transposed to (in, out) layout for the kernel."""
    k1, k2, k3, k4 = jax.random.split(key, 4)
    w1_pt = jax.random.normal(k1, (hidden_size, input_size), dtype) * 0.1
    b1 = jax.random.normal(k2, (hidden_size,), dtype) * 0.1
    w2_pt = jax.random.normal(k3, (output_size, hidden_size), dtype) * 0.1
    b2 = jax.random.normal(k4, (output_size,), dtype) * 0.1
    return w1_pt.T, b1, w2_pt.T, b2


def reference_forward_f32(x, w1_t, b1, w2_t, b2):
    h = jnp.maximum(x @ w1_t + b1, 0.0)
    return h @ w2_t + b2


def reference_forward_bf16(x, w1_t, b1, w2_t, b2):
    """Matches the kernel's precision path: bf16 matmul inputs, f32 accumulate."""
    h = jnp.dot(x.astype(jnp.bfloat16), w1_t.astype(jnp.bfloat16),
                preferred_element_type=jnp.float32) + b1
    h = jnp.maximum(h, 0.0)
    return jnp.dot(h.astype(jnp.bfloat16), w2_t.astype(jnp.bfloat16),
                   preferred_element_type=jnp.float32) + b2


# TODO(synk): compute_fisher / consolidate / ewc_loss are optimizer-side state
# updates over gradients (not part of forward()); they stay in plain JAX/optax.

if __name__ == "__main__":
    key = jax.random.PRNGKey(0)

    # ---- Test 1: small shapes, fused (fully-resident-weights) path ----------
    input_size, hidden_size, output_size = 32, 64, 16
    batch = 8
    kx, kp, kx2, kp2 = jax.random.split(key, 4)
    x = jax.random.normal(kx, (batch, input_size), jnp.float32)
    w1_t, b1, w2_t, b2 = make_params(kp, input_size, hidden_size, output_size)
    (w1p, b1p, w2p, b2p), out_f = prepare_params(w1_t, b1, w2_t, b2)

    out = ewc_forward(x, w1p, b1p, w2p, b2p, out_features=out_f)
    out = jax.block_until_ready(out)
    assert out.shape == (batch, output_size)

    ref_bf16 = reference_forward_bf16(x, w1_t, b1, w2_t, b2)
    assert jnp.allclose(out, ref_bf16, atol=1e-4, rtol=1e-4), \
        "fused path: mismatch vs bf16-matched reference"
    ref_f32 = reference_forward_f32(x, w1_t, b1, w2_t, b2)
    assert jnp.allclose(out, ref_f32, atol=5e-2, rtol=5e-2), \
        "fused path: mismatch vs f32 reference"

    # ---- Test 2: force the hidden-tiled (contraction-split) path ------------
    input_size2, hidden_size2, output_size2 = 48, 384, 24
    batch2 = 40
    x2 = jax.random.normal(kx2, (batch2, input_size2), jnp.float32)
    w1_t2, b1_2, w2_t2, b2_2 = make_params(kp2, input_size2, hidden_size2,
                                           output_size2)
    (w1p2, b1p2, w2p2, b2p2), out_f2 = prepare_params(w1_t2, b1_2, w2_t2, b2_2)

    out2 = ewc_forward(x2, w1p2, b1p2, w2p2, b2p2, out_features=out_f2,
                       hidden_tile=128)     # 3 reduction steps over hid_p=384
    out2 = jax.block_until_ready(out2)
    assert out2.shape == (batch2, output_size2)

    ref2_bf16 = reference_forward_bf16(x2, w1_t2, b1_2, w2_t2, b2_2)
    assert jnp.allclose(out2, ref2_bf16, atol=2e-3, rtol=2e-3), \
        "tiled path: mismatch vs bf16-matched reference"
    ref2_f32 = reference_forward_f32(x2, w1_t2, b1_2, w2_t2, b2_2)
    assert jnp.allclose(out2, ref2_f32, atol=5e-2, rtol=5e-2), \
        "tiled path: mismatch vs f32 reference"

    print("KERNEL_OK")
</pallas_src>

<mosaic_0001>
module attributes {stable_mosaic.version = 11 : i64} {
  func.func @mlp_fused_kernel(%arg0: i32, %arg1: memref<16x128xbf16, #tpu.memory_space<vmem>>, %arg2: memref<128x128xbf16, #tpu.memory_space<vmem>>, %arg3: memref<1x128xf32, #tpu.memory_space<vmem>>, %arg4: memref<128x128xbf16, #tpu.memory_space<vmem>>, %arg5: memref<1x128xf32, #tpu.memory_space<vmem>>, %arg6: memref<16x128xf32, #tpu.memory_space<vmem>>) attributes {dimension_semantics = [#tpu.dimension_semantics<parallel>], iteration_bounds = array<i64: 1>, scalar_prefetch = 0 : i64, scratch_operands = 0 : i64, tpu.core_type = #tpu.core_type<tc>, window_params = [{transform_indices = @transform_0, window_bounds = array<i64: 16, 128>}, {pipeline_mode = #tpu.pipeline_mode<synchronous>, transform_indices = @transform_1, window_bounds = array<i64: 128, 128>}, {pipeline_mode = #tpu.pipeline_mode<synchronous>, transform_indices = @transform_2, window_bounds = array<i64: 1, 128>}, {pipeline_mode = #tpu.pipeline_mode<synchronous>, transform_indices = @transform_3, window_bounds = array<i64: 128, 128>}, {pipeline_mode = #tpu.pipeline_mode<synchronous>, transform_indices = @transform_4, window_bounds = array<i64: 1, 128>}, {transform_indices = @transform_5, window_bounds = array<i64: 16, 128>}]} {
    %c0 = arith.constant 0 : index
    %c0_0 = arith.constant 0 : index
    %0 = vector.load %arg1[%c0, %c0_0] : memref<16x128xbf16, #tpu.memory_space<vmem>>, vector<16x128xbf16>
    %c0_1 = arith.constant 0 : index
    %c0_2 = arith.constant 0 : index
    %1 = vector.load %arg2[%c0_1, %c0_2] : memref<128x128xbf16, #tpu.memory_space<vmem>>, vector<128x128xbf16>
    %cst = arith.constant dense<0.000000e+00> : vector<16x128xf32>
    %2 = tpu.matmul %0, %1, %cst {dimension_numbers = #tpu.dot_dimension_numbers<[1], [0], [0], [1], [0, 0, 1, 1], [], []>} : vector<16x128xbf16>, vector<128x128xbf16>, vector<16x128xf32> -> vector<16x128xf32>
    %c0_3 = arith.constant 0 : index
    %c0_4 = arith.constant 0 : index
    %3 = vector.load %arg3[%c0_3, %c0_4] : memref<1x128xf32, #tpu.memory_space<vmem>>, vector<1x128xf32>
    %4 = vector.broadcast %3 : vector<1x128xf32> to vector<16x128xf32>
    %5 = arith.addf %2, %4 : vector<16x128xf32>
    %cst_5 = arith.constant 0.000000e+00 : f32
    %6 = vector.broadcast %cst_5 : f32 to vector<16x128xf32>
    %7 = arith.maximumf %5, %6 : vector<16x128xf32>
    %8 = arith.truncf %7 : vector<16x128xf32> to vector<16x128xbf16>
    %c0_6 = arith.constant 0 : index
    %c0_7 = arith.constant 0 : index
    %9 = vector.load %arg4[%c0_6, %c0_7] : memref<128x128xbf16, #tpu.memory_space<vmem>>, vector<128x128xbf16>
    %cst_8 = arith.constant dense<0.000000e+00> : vector<16x128xf32>
    %10 = tpu.matmul %8, %9, %cst_8 {dimension_numbers = #tpu.dot_dimension_numbers<[1], [0], [0], [1], [0, 0, 1, 1], [], []>} : vector<16x128xbf16>, vector<128x128xbf16>, vector<16x128xf32> -> vector<16x128xf32>
    %c0_9 = arith.constant 0 : index
    %c0_10 = arith.constant 0 : index
    %11 = vector.load %arg5[%c0_9, %c0_10] : memref<1x128xf32, #tpu.memory_space<vmem>>, vector<1x128xf32>
    %12 = vector.broadcast %11 : vector<1x128xf32> to vector<16x128xf32>
    %13 = arith.addf %10, %12 : vector<16x128xf32>
    %c0_11 = arith.constant 0 : index
    %c0_12 = arith.constant 0 : index
    %14 = vector.load %arg6[%c0_11, %c0_12] : memref<16x128xf32, #tpu.memory_space<vmem>>, vector<16x128xf32>
    tpu.vector_store %arg6[%c0_11, %c0_12], %13 {strides = array<i32>} : memref<16x128xf32, #tpu.memory_space<vmem>>, vector<16x128xf32>,
    return
  }
  func.func @transform_0(%arg0: i32) -> (i32, i32) {
    %c0_i32 = arith.constant 0 : i32
    %c0_i32_0 = arith.constant 0 : i32
    return %arg0, %c0_i32 : i32, i32
  }
  func.func @transform_1(%arg0: i32) -> (i32, i32) {
    %c0_i32 = arith.constant 0 : i32
    %c0_i32_0 = arith.constant 0 : i32
    %c0_i32_1 = arith.constant 0 : i32
    return %c0_i32, %c0_i32_0 : i32, i32
  }
  func.func @transform_2(%arg0: i32) -> (i32, i32) {
    %c0_i32 = arith.constant 0 : i32
    %c0_i32_0 = arith.constant 0 : i32
    %c0_i32_1 = arith.constant 0 : i32
    return %c0_i32, %c0_i32_0 : i32, i32
  }
  func.func @transform_3(%arg0: i32) -> (i32, i32) {
    %c0_i32 = arith.constant 0 : i32
    %c0_i32_0 = arith.constant 0 : i32
    %c0_i32_1 = arith.constant 0 : i32
    return %c0_i32, %c0_i32_0 : i32, i32
  }
  func.func @transform_4(%arg0: i32) -> (i32, i32) {
    %c0_i32 = arith.constant 0 : i32
    %c0_i32_0 = arith.constant 0 : i32
    %c0_i32_1 = arith.constant 0 : i32
    return %c0_i32, %c0_i32_0 : i32, i32
  }
  func.func @transform_5(%arg0: i32) -> (i32, i32) {
    %c0_i32 = arith.constant 0 : i32
    %c0_i32_0 = arith.constant 0 : i32
    return %arg0, %c0_i32 : i32, i32
  }
}

</mosaic_0001>

<llo_original>
// kernel: ewc_forward.1
$region0: #{ewc_forward.1}
  #allocation0 [shape = 'u32[]', space=smem, size = 0x4, offset = 0x4, fixed_abs, tag = 'smem constant byte address 0x4 - core index']
  #allocation1 [shape = 'u32[144,128]{1,0:T(1,128)}', space=vmem, size = 0x12000, scoped, tag = 'internal scratch']
  %s0 = inlined_call_operand.vmem [shape: bf16[16,128], index: 0, kind: input, shape index: {}]
  %s1 = inlined_call_operand.hbm [shape: bf16[128,128], index: 1, kind: input, shape index: {}]
  %s2 = inlined_call_operand.vmem [shape: f32[1,128], index: 2, kind: input, shape index: {}]
  %s3 = inlined_call_operand.hbm [shape: bf16[128,128], index: 3, kind: input, shape index: {}]
  %s4 = inlined_call_operand.vmem [shape: f32[1,128], index: 4, kind: input, shape index: {}]
  %s5 = inlined_call_operand.vmem [shape: f32[16,128], index: 5, kind: output, shape index: {}]
  %s6 = sld [smem:[#allocation0]]
  $region38: #{ewc_forward.1} parent=0
    _
  %s8 = ssub.s32 1, %s6
  %s9 = scalar_select 0, %s8, %s6
  $region1: #{ewc_forward.1} parent=0
    #allocation2 [shape = 'u8[32768]{0}', space=vmem, size = 0x8000, scoped, tag = 'input window, operand 1, single buffered']
    #allocation3 [shape = 's32[1]{0}', space=sflag, size = 0x4, scoped, tag = 'scoped memory for ewc_forward.1']
    #allocation4 [shape = 'u8[32768]{0}', space=vmem, size = 0x8000, scoped, tag = 'input window, operand 3, single buffered']
    #allocation5 [shape = 's32[1]{0}', space=sflag, size = 0x4, scoped, tag = 'scoped memory for ewc_forward.1']
    %10 = vsyncpa [#allocation3], 0
    %11 = vsyncpa [#allocation5], 0
    // Predicated region
    $region2: #{ewc_forward.1} parent=1 // pred_check
      _
    $region3: #{ewc_forward.1} parent=1 // pred_check_branch
      %13 = sbr.rel (0) target = $region5
    $region4: #{ewc_forward.1} parent=1 // pred_region
      _
    $region5: #{ewc_forward.1} parent=1 // pred_fallthru
      _
    // Predicated region
    $region6: #{ewc_forward.1} parent=1 // pred_check
      _
    $region7: #{ewc_forward.1} parent=1 // pred_check_branch
      %15 = sbr.rel (0) target = $region9
    $region8: #{ewc_forward.1} parent=1 // pred_region
      %s17 = ssub.s32 1024, 1024
      %18 = vsyncadd [#allocation3], %s17
      %s19 = sshll.u32 [#allocation2], 4
      %s20 = int_to_ptr.vmem [resolvable:$true] %s19
      %25 = dma.hbm_to_vmem [thread:$0]  %s1, 1024, %s20, [#allocation3], 64, 64, 4
    $region9: #{ewc_forward.1} parent=1 // pred_fallthru
      _
    // Predicated region
    $region10: #{ewc_forward.1} parent=1 // pred_check
      _
    $region11: #{ewc_forward.1} parent=1 // pred_check_branch
      %27 = sbr.rel (0) target = $region13
    $region12: #{ewc_forward.1} parent=1 // pred_region
      _
    $region13: #{ewc_forward.1} parent=1 // pred_fallthru
      _
    // Predicated region
    $region14: #{ewc_forward.1} parent=1 // pred_check
      _
    $region15: #{ewc_forward.1} parent=1 // pred_check_branch
      %29 = sbr.rel (0) target = $region17
    $region16: #{ewc_forward.1} parent=1 // pred_region
      %s31 = ssub.s32 1024, 1024
      %32 = vsyncadd [#allocation5], %s31
      %s33 = sshll.u32 [#allocation4], 4
      %s34 = int_to_ptr.vmem [resolvable:$true] %s33
      %39 = dma.hbm_to_vmem [thread:$0]  %s3, 1024, %s34, [#allocation5], 64, 64, 4
    $region17: #{ewc_forward.1} parent=1 // pred_fallthru
      _
    // Predicated region
    $region18: #{ewc_forward.1} parent=1 // pred_check
      _
    $region19: #{ewc_forward.1} parent=1 // pred_check_branch
      %41 = sbr.rel (0) target = $region21
    $region20: #{ewc_forward.1} parent=1 // pred_region
      _
    $region21: #{ewc_forward.1} parent=1 // pred_fallthru
      _
    // Predicated region
    $region22: #{ewc_forward.1} parent=1 // pred_check
      _
    $region23: #{ewc_forward.1} parent=1 // pred_check_branch
      %43 = sbr.rel (0) target = $region25
    $region24: #{ewc_forward.1} parent=1 // pred_region
      %44 = dma.done [#allocation3], 1024
    $region25: #{ewc_forward.1} parent=1 // pred_fallthru
      _
    // Predicated region
    $region26: #{ewc_forward.1} parent=1 // pred_check
      _
    $region27: #{ewc_forward.1} parent=1 // pred_check_branch
      %46 = sbr.rel (0) target = $region29
    $region28: #{ewc_forward.1} parent=1 // pred_region
      %47 = dma.done [#allocation5], 1024
    $region29: #{ewc_forward.1} parent=1 // pred_fallthru
      _
    %v49 = vld [vmem:[%s0] sm:$0xf]
    %v50 = vld [vmem:[%s0 + $0x4] sm:$0xf]
    %v51 = vld [vmem:[#allocation2] sm:$0xf]
    %v52 = vld [vmem:[#allocation2 + $0x4] sm:$0xf]
    %v53 = vld [vmem:[#allocation2 + $0x8] sm:$0xf]
    %v54 = vld [vmem:[#allocation2 + $0xc] sm:$0xf]
    %v55 = vld [vmem:[#allocation2 + $0x10] sm:$0xf]
    %v56 = vld [vmem:[#allocation2 + $0x14] sm:$0xf]
    %v57 = vld [vmem:[#allocation2 + $0x18] sm:$0xf]
    %v58 = vld [vmem:[#allocation2 + $0x1c] sm:$0xf]
    %v59 = vld [vmem:[#allocation2 + $0x20] sm:$0xf]
    %v60 = vld [vmem:[#allocation2 + $0x24] sm:$0xf]
    %v61 = vld [vmem:[#allocation2 + $0x28] sm:$0xf]
    %v62 = vld [vmem:[#allocation2 + $0x2c] sm:$0xf]
    %v63 = vld [vmem:[#allocation2 + $0x30] sm:$0xf]
    %v64 = vld [vmem:[#allocation2 + $0x34] sm:$0xf]
    %v65 = vld [vmem:[#allocation2 + $0x38] sm:$0xf]
    %v66 = vld [vmem:[#allocation2 + $0x3c] sm:$0xf]
    %v67 = vld [vmem:[%s2] sm:$0x1]
    %v69 = vlaneseq
    %v70 = vshrl.u32 %v69, 7
    %v71 = vsub.s32 0, %v70
    %v72 = vrot.slane %v67, %v71
    %v76 = vunpack.c.l.b16 %v49
    %v77 = vunpack.c.l.b16 %v50
    %v78 = vpack.c.b16 %v77, %v76
    %v96 = vunpack.c.l.b16 %v51
    %v97 = vunpack.c.l.b16 %v52
    %v98 = vunpack.c.l.b16 %v53
    %v99 = vunpack.c.l.b16 %v54
    %v100 = vunpack.c.l.b16 %v55
    %v101 = vunpack.c.l.b16 %v56
    %v102 = vunpack.c.l.b16 %v57
    %v103 = vunpack.c.l.b16 %v58
    %v104 = vunpack.c.l.b16 %v59
    %v105 = vunpack.c.l.b16 %v60
    %v106 = vunpack.c.l.b16 %v61
    %v107 = vunpack.c.l.b16 %v62
    %v108 = vunpack.c.l.b16 %v63
    %v109 = vunpack.c.l.b16 %v64
    %v110 = vunpack.c.l.b16 %v65
    %v111 = vunpack.c.l.b16 %v66
    %v112 = vpack.c.b16 %v97, %v96
    %v113 = vpack.c.b16 %v99, %v98
    %v114 = vpack.c.b16 %v101, %v100
    %v115 = vpack.c.b16 %v103, %v102
    %v116 = vpack.c.b16 %v105, %v104
    %v117 = vpack.c.b16 %v107, %v106
    %v118 = vpack.c.b16 %v109, %v108
    %v119 = vpack.c.b16 %v111, %v110
    %128 = vmatprep.subr.bf16.mxu0 0
    %129 = vmatpush1.bf16.msra.mxu0 %v112
    %130 = vmatprep.subr.bf16.mxu0 0
    %131 = vmatpush1.bf16.msra.mxu0 %v113
    %132 = vmatprep.subr.bf16.mxu0 0
    %133 = vmatpush1.bf16.msra.mxu0 %v114
    %134 = vmatprep.subr.bf16.mxu0 0
    %135 = vmatpush1.bf16.msra.mxu0 %v115
    %136 = vmatprep.subr.bf16.mxu0 0
    %137 = vmatpush1.bf16.msra.mxu0 %v116
    %138 = vmatprep.subr.bf16.mxu0 0
    %139 = vmatpush1.bf16.msra.mxu0 %v117
    %140 = vmatprep.subr.bf16.mxu0 0
    %141 = vmatpush1.bf16.msra.mxu0 %v118
    %142 = vmatprep.subr.bf16.mxu0 0
    %143 = vmatpush1.bf16.msra.mxu0 %v119
    %144 = vmatprep.subr.bf16.mxu0 0
    %145 = vmatpush1.bf16.msra.mxu0 0
    %146 = vmatprep.subr.bf16.mxu0 0
    %147 = vmatpush1.bf16.msra.mxu0 0
    %148 = vmatprep.subr.bf16.mxu0 0
    %149 = vmatpush1.bf16.msra.mxu0 0
    %150 = vmatprep.subr.bf16.mxu0 0
    %151 = vmatpush1.bf16.msra.mxu0 0
    %152 = vmatprep.subr.bf16.mxu0 0
    %153 = vmatpush1.bf16.msra.mxu0 0
    %154 = vmatprep.subr.bf16.mxu0 0
    %155 = vmatpush1.bf16.msra.mxu0 0
    %156 = vmatprep.subr.bf16.mxu0 0
    %157 = vmatpush1.bf16.msra.mxu0 0
    %158 = vmatprep.subr.bf16.mxu0 0
    %159 = vmatpush1.bf16.msra.mxu0 0
    %160 = vmatprep.mubr.bf16.mxu0 0
    %161 = vmatmul.mubr.bf16.gmra.mrb[0].mxu0 %v78
    %v162 = vpop.f32.mrb[0].mxu0
    %v163 = vadd.f32 %v72, %v162
    %v164 = vpop.f32.mrb[0].mxu0
    %v165 = vpop.f32.mrb[0].mxu0
    %v166 = vadd.f32 %v72, %v165
    %v167 = vpop.f32.mrb[0].mxu0
    %168 = vdwg.mxu0
    %v169 = vmax.f32 %v163, 0.0
    %v170 = vmax.f32 %v166, 0.0
    %v171 = vpack.c.bf16 %v170, %v169
    %v172 = vld [vmem:[#allocation4] sm:$0xf]
    %v173 = vld [vmem:[#allocation4 + $0x4] sm:$0xf]
    %v174 = vld [vmem:[#allocation4 + $0x8] sm:$0xf]
    %v175 = vld [vmem:[#allocation4 + $0xc] sm:$0xf]
    %v176 = vld [vmem:[#allocation4 + $0x10] sm:$0xf]
    %v177 = vld [vmem:[#allocation4 + $0x14] sm:$0xf]
    %v178 = vld [vmem:[#allocation4 + $0x18] sm:$0xf]
    %v179 = vld [vmem:[#allocation4 + $0x1c] sm:$0xf]
    %v180 = vld [vmem:[#allocation4 + $0x20] sm:$0xf]
    %v181 = vld [vmem:[#allocation4 + $0x24] sm:$0xf]
    %v182 = vld [vmem:[#allocation4 + $0x28] sm:$0xf]
    %v183 = vld [vmem:[#allocation4 + $0x2c] sm:$0xf]
    %v184 = vld [vmem:[#allocation4 + $0x30] sm:$0xf]
    %v185 = vld [vmem:[#allocation4 + $0x34] sm:$0xf]
    %v186 = vld [vmem:[#allocation4 + $0x38] sm:$0xf]
    %v187 = vld [vmem:[#allocation4 + $0x3c] sm:$0xf]
    %v188 = vld [vmem:[%s4] sm:$0x1]
    %v190 = vlaneseq
    %v191 = vshrl.u32 %v190, 7
    %v192 = vsub.s32 0, %v191
    %v193 = vrot.slane %v188, %v192
    %v211 = vunpack.c.l.b16 %v172
    %v212 = vunpack.c.l.b16 %v173
    %v213 = vunpack.c.l.b16 %v174
    %v214 = vunpack.c.l.b16 %v175
    %v215 = vunpack.c.l.b16 %v176
    %v216 = vunpack.c.l.b16 %v177
    %v217 = vunpack.c.l.b16 %v178
    %v218 = vunpack.c.l.b16 %v179
    %v219 = vunpack.c.l.b16 %v180
    %v220 = vunpack.c.l.b16 %v181
    %v221 = vunpack.c.l.b16 %v182
    %v222 = vunpack.c.l.b16 %v183
    %v223 = vunpack.c.l.b16 %v184
    %v224 = vunpack.c.l.b16 %v185
    %v225 = vunpack.c.l.b16 %v186
    %v226 = vunpack.c.l.b16 %v187
    %v227 = vpack.c.b16 %v212, %v211
    %v228 = vpack.c.b16 %v214, %v213
    %v229 = vpack.c.b16 %v216, %v215
    %v230 = vpack.c.b16 %v218, %v217
    %v231 = vpack.c.b16 %v220, %v219
    %v232 = vpack.c.b16 %v222, %v221
    %v233 = vpack.c.b16 %v224, %v223
    %v234 = vpack.c.b16 %v226, %v225
    %243 = vmatprep.subr.bf16.mxu0 0
    %244 = vmatpush1.bf16.msra.mxu0 %v227
    %245 = vmatprep.subr.bf16.mxu0 0
    %246 = vmatpush1.bf16.msra.mxu0 %v228
    %247 = vmatprep.subr.bf16.mxu0 0
    %248 = vmatpush1.bf16.msra.mxu0 %v229
    %249 = vmatprep.subr.bf16.mxu0 0
    %250 = vmatpush1.bf16.msra.mxu0 %v230
    %251 = vmatprep.subr.bf16.mxu0 0
    %252 = vmatpush1.bf16.msra.mxu0 %v231
    %253 = vmatprep.subr.bf16.mxu0 0
    %254 = vmatpush1.bf16.msra.mxu0 %v232
    %255 = vmatprep.subr.bf16.mxu0 0
    %256 = vmatpush1.bf16.msra.mxu0 %v233
    %257 = vmatprep.subr.bf16.mxu0 0
    %258 = vmatpush1.bf16.msra.mxu0 %v234
    %259 = vmatprep.subr.bf16.mxu0 0
    %260 = vmatpush1.bf16.msra.mxu0 0
    %261 = vmatprep.subr.bf16.mxu0 0
    %262 = vmatpush1.bf16.msra.mxu0 0
    %263 = vmatprep.subr.bf16.mxu0 0
    %264 = vmatpush1.bf16.msra.mxu0 0
    %265 = vmatprep.subr.bf16.mxu0 0
    %266 = vmatpush1.bf16.msra.mxu0 0
    %267 = vmatprep.subr.bf16.mxu0 0
    %268 = vmatpush1.bf16.msra.mxu0 0
    %269 = vmatprep.subr.bf16.mxu0 0
    %270 = vmatpush1.bf16.msra.mxu0 0
    %271 = vmatprep.subr.bf16.mxu0 0
    %272 = vmatpush1.bf16.msra.mxu0 0
    %273 = vmatprep.subr.bf16.mxu0 0
    %274 = vmatpush1.bf16.msra.mxu0 0
    %275 = vmatprep.mubr.bf16.mxu0 0
    %276 = vmatmul.mubr.bf16.gmra.mrb[0].mxu0 %v171
    %v277 = vpop.f32.mrb[0].mxu0
    %v278 = vadd.f32 %v193, %v277
    %v279 = vpop.f32.mrb[0].mxu0
    %v280 = vpop.f32.mrb[0].mxu0
    %v281 = vadd.f32 %v193, %v280
    %v282 = vpop.f32.mrb[0].mxu0
    %283 = vdwg.mxu0
    %284 = vst [vmem:[%s5] sm:$0xff] %v278
    %285 = vst [vmem:[%s5 + $0x8] sm:$0xff] %v281
    // Predicated region
    $region30: #{ewc_forward.1} parent=1 // pred_check
      _
    $region31: #{ewc_forward.1} parent=1 // pred_check_branch
      %287 = sbr.rel (0) target = $region33
    $region32: #{ewc_forward.1} parent=1 // pred_region
      _
    $region33: #{ewc_forward.1} parent=1 // pred_fallthru
      _
    // Predicated region
    $region34: #{ewc_forward.1} parent=1 // pred_check
      _
    $region35: #{ewc_forward.1} parent=1 // pred_check_branch
      %289 = sbr.rel (0) target = $region37
    $region36: #{ewc_forward.1} parent=1 // pred_region
      _
    $region37: #{ewc_forward.1} parent=1 // pred_fallthru
      _
    %290 = vsyncpa [#allocation3], 1
    %291 = vsyncpa [#allocation5], 1

</llo_original>
